<compile_context>
chip_gen: v5e
topology: v5e:2x2
jax: 0.10.0
libtpu: 0.0.40
codegen_flags: <defaults>
</compile_context>

<pallas_src>
import functools

import jax
import jax.numpy as jnp
from jax import lax
from jax.experimental import pallas as pl
from jax.experimental.pallas import tpu as pltpu


# --------------------------------------------------------------------------- #
# helpers
# --------------------------------------------------------------------------- #
def _round_up(x, m):
    return ((x + m - 1) // m) * m


def _nearest_indices(t_out, t_in):
    # PyTorch F.interpolate(mode='nearest'): src = floor(dst * t_in / t_out).
    idx = (jnp.arange(t_out, dtype=jnp.int32) * t_in) // t_out
    return jnp.minimum(idx, t_in - 1)


def _pick_time_tile(t_pad, target):
    """Largest multiple-of-128 tile <= target that divides t_pad (t_pad % 128 == 0)."""
    if t_pad <= target:
        return t_pad
    tile = max((target // 128) * 128, 128)
    while t_pad % tile != 0:
        tile -= 128
    return tile


def _vmem_limit(footprint_bytes):
    try:
        cap = int(pltpu.get_tpu_info().vmem_capacity_bytes)
    except Exception:
        cap = 64 * 1024 * 1024          # assume the smallest (v7x) if query fails
    budget = cap * 3 // 4
    want = int(2 * footprint_bytes) + (8 << 20)
    return max(min(want, budget), 16 << 20)


# --------------------------------------------------------------------------- #
# shared gLN epilogue (runs inside both kernels)
# --------------------------------------------------------------------------- #
def _gln_tail(y, o_ref, stat_ref, g_ref, be_ref, *, t_true, tile_t, n_t, eps):
    """y: f32 (C_out, tile_t) pre-norm conv output for the current time tile."""
    t = pl.program_id(1)
    c_out = o_ref.shape[1]
    inv_n = 1.0 / float(c_out * t_true)
    gamma = g_ref[...].astype(jnp.float32)            # (C_out, 1)
    beta = be_ref[...].astype(jnp.float32)            # (C_out, 1)

    # Mask time-padding columns out of the statistics (only the last tile pads).
    if tile_t * n_t == t_true:
        ym = y
    else:
        col = lax.broadcasted_iota(jnp.int32, (1, tile_t), 1) + t * tile_t
        ym = jnp.where(col < t_true, y, 0.0)

    if n_t == 1:
        # Single-tile fast path: normalize in registers, one lane-dense store.
        s = jnp.sum(ym)
        q = jnp.sum(ym * ym)
        mean = s * inv_n
        var = jnp.maximum(q * inv_n - mean * mean, 0.0)
        scale = gamma * lax.rsqrt(var + eps)
        shift = beta - mean * scale
        o_ref[0] = (y * scale + shift).astype(o_ref.dtype)
        return

    @pl.when(t == 0)
    def _():
        stat_ref[...] = jnp.zeros_like(stat_ref)

    # Lane-aligned VPU partial sums: no per-tile XLU full reduce / SMEM scalars.
    s0 = jnp.zeros((c_out, 128), jnp.float32)
    s1 = jnp.zeros((c_out, 128), jnp.float32)
    for c in range(tile_t // 128):                    # tile_t is a 128 multiple
        blk = ym[:, c * 128:(c + 1) * 128]
        s0 = s0 + blk
        s1 = s1 + blk * blk
    stat_ref[0] = stat_ref[0] + s0
    stat_ref[1] = stat_ref[1] + s1

    off = pl.multiple_of(t * tile_t, 128)
    o_ref[0, :, pl.ds(off, tile_t)] = y.astype(o_ref.dtype)

    @pl.when(t == n_t - 1)
    def _():
        s = jnp.sum(stat_ref[0])
        q = jnp.sum(stat_ref[1])
        mean = s * inv_n
        var = jnp.maximum(q * inv_n - mean * mean, 0.0)
        scale = gamma * lax.rsqrt(var + eps)
        shift = beta - mean * scale

        # Chunked finalize: bounds vreg pressure / exposed store burst (v5e).
        def body(i, carry):
            o = pl.multiple_of(i * tile_t, 128)
            blk = o_ref[0, :, pl.ds(o, tile_t)].astype(jnp.float32)
            o_ref[0, :, pl.ds(o, tile_t)] = (blk * scale + shift).astype(o_ref.dtype)
            return carry

        lax.fori_loop(0, n_t, body, 0)


# --------------------------------------------------------------------------- #
# kernel bodies
# --------------------------------------------------------------------------- #
def _fc_gln_split_kernel(x1_ref, x2_ref, w_ref, b_ref, g_ref, be_ref,
                         o_ref, stat_ref, *, c1, fuse_k, t_true, tile_t, n_t, eps):
    # 1x1 conv over the channel concat without materializing the concat in HBM.
    if fuse_k:
        xc = jnp.concatenate([x1_ref[0], x2_ref[0]], axis=0)
        y = jnp.dot(w_ref[...], xc, preferred_element_type=jnp.float32)
    else:
        w = w_ref[...]
        y = jnp.dot(w[:, :c1], x1_ref[0], preferred_element_type=jnp.float32)
        y = y + jnp.dot(w[:, c1:], x2_ref[0], preferred_element_type=jnp.float32)
    y = y + b_ref[...].astype(jnp.float32)
    _gln_tail(y, o_ref, stat_ref, g_ref, be_ref,
              t_true=t_true, tile_t=tile_t, n_t=n_t, eps=eps)


def _fc_gln_gather_kernel(x1_ref, z2_ref, idx_ref, w1_ref, b_ref, g_ref, be_ref,
                          o_ref, stat_ref, *, t_true, tile_t, n_t, eps):
    y = jnp.dot(w1_ref[...], x1_ref[0], preferred_element_type=jnp.float32)
    # Nearest-neighbour upsample of the already-projected other modality via a
    # one-hot MXU matmul (the 1x1 conv commutes with the time gather), reading
    # only the tiny VMEM-resident (C_out, T2) projection.
    t2 = z2_ref.shape[2]
    src = idx_ref[...]                                        # (1, tile_t) int32
    row = lax.broadcasted_iota(jnp.int32, (t2, 1), 0)          # (t2, 1)
    onehot = (row == src).astype(z2_ref.dtype)                 # (t2, tile_t)
    y = y + jnp.dot(z2_ref[0], onehot, preferred_element_type=jnp.float32)
    y = y + b_ref[...].astype(jnp.float32)
    _gln_tail(y, o_ref, stat_ref, g_ref, be_ref,
              t_true=t_true, tile_t=tile_t, n_t=n_t, eps=eps)


# --------------------------------------------------------------------------- #
# pallas_call wrappers
# --------------------------------------------------------------------------- #
def _conv_gln_split(x1, x2, w1, w2, bias, gamma, beta, *, eps, t_tile_target):
    """gLN(w1 @ x1 + w2 @ x2 + bias); x1 and x2 share the time axis."""
    B, c1, t_true = x1.shape
    _, c2, _ = x2.shape
    c_out = w1.shape[0]

    t_pad = _round_up(t_true, 128)
    if t_pad != t_true:
        pad = ((0, 0), (0, 0), (0, t_pad - t_true))
        x1 = jnp.pad(x1, pad)
        x2 = jnp.pad(x2, pad)
    tile_t = _pick_time_tile(t_pad, t_tile_target)
    n_t = t_pad // tile_t

    w = jnp.concatenate([w1, w2], axis=1)                      # (C_out, C1+C2)
    # Fuse the two dots only when K fits one MXU tile and the concat point is
    # sublane aligned for the compute dtype (8 rows for 32-bit, 16 for 16-bit).
    sub = 8 * 4 // jnp.dtype(x1.dtype).itemsize
    fuse_k = (c1 + c2) <= 256 and (c1 % sub == 0)

    bias2 = bias.reshape(c_out, 1).astype(jnp.float32)
    gamma2 = gamma.reshape(c_out, 1).astype(jnp.float32)
    beta2 = beta.reshape(c_out, 1).astype(jnp.float32)

    out_dtype = x1.dtype
    e_in = jnp.dtype(x1.dtype).itemsize
    footprint = (2 * (c1 + c2) * tile_t * e_in          # double-buffered input tiles
                 + c_out * (c1 + c2) * e_in + 3 * c_out * 4
                 + 2 * c_out * t_pad * e_in             # resident output slab
                 + 2 * c_out * 128 * 4                  # stats scratch
                 + 2 * c_out * tile_t * 4)              # f32 staging slack

    kern = functools.partial(_fc_gln_split_kernel, c1=c1, fuse_k=fuse_k,
                             t_true=t_true, tile_t=tile_t, n_t=n_t, eps=eps)
    out = pl.pallas_call(
        kern,
        out_shape=jax.ShapeDtypeStruct((B, c_out, t_pad), out_dtype),
        grid_spec=pltpu.PrefetchScalarGridSpec(
            num_scalar_prefetch=0,
            grid=(B, n_t),
            in_specs=[
                pl.BlockSpec((1, c1, tile_t), lambda b, t: (b, 0, t)),
                pl.BlockSpec((1, c2, tile_t), lambda b, t: (b, 0, t)),
                pl.BlockSpec((c_out, c1 + c2), lambda b, t: (0, 0)),
                pl.BlockSpec((c_out, 1), lambda b, t: (0, 0)),
                pl.BlockSpec((c_out, 1), lambda b, t: (0, 0)),
                pl.BlockSpec((c_out, 1), lambda b, t: (0, 0)),
            ],
            out_specs=pl.BlockSpec((1, c_out, t_pad), lambda b, t: (b, 0, 0)),
            scratch_shapes=[pltpu.VMEM((2, c_out, 128), jnp.float32)],
        ),
        compiler_params=pltpu.CompilerParams(
            dimension_semantics=("parallel", "arbitrary"),
            vmem_limit_bytes=_vmem_limit(footprint)),
    )(x1, x2, w, bias2, gamma2, beta2)
    return out if t_pad == t_true else out[:, :, :t_true]


def _conv_gln_gather(x1, z2, w1, bias, gamma, beta, *, eps, t_tile_target):
    """gLN(w1 @ x1 + nearest_upsample(z2 -> T) + bias); z2 already projected to C_out."""
    B, c1, t_true = x1.shape
    _, c_out, t2 = z2.shape

    t_pad = _round_up(t_true, 128)
    if t_pad != t_true:
        x1 = jnp.pad(x1, ((0, 0), (0, 0), (0, t_pad - t_true)))
    idx = _nearest_indices(t_true, t2)
    if t_pad != t_true:
        idx = jnp.concatenate(
            [idx, jnp.full((t_pad - t_true,), t2 - 1, jnp.int32)])
    idx = idx.reshape(1, t_pad)

    tile_t = _pick_time_tile(t_pad, t_tile_target)
    n_t = t_pad // tile_t

    bias2 = bias.reshape(c_out, 1).astype(jnp.float32)
    gamma2 = gamma.reshape(c_out, 1).astype(jnp.float32)
    beta2 = beta.reshape(c_out, 1).astype(jnp.float32)

    out_dtype = x1.dtype
    e_in = jnp.dtype(x1.dtype).itemsize
    footprint = (2 * c1 * tile_t * e_in                 # double-buffered x1 tiles
                 + 2 * c_out * t2 * e_in + 2 * tile_t * 4
                 + c_out * c1 * e_in + 3 * c_out * 4
                 + 2 * c_out * t_pad * e_in             # resident output slab
                 + 2 * c_out * 128 * 4                  # stats scratch
                 + 2 * c_out * tile_t * 4 + t2 * tile_t * e_in)

    kern = functools.partial(_fc_gln_gather_kernel, t_true=t_true,
                             tile_t=tile_t, n_t=n_t, eps=eps)
    out = pl.pallas_call(
        kern,
        out_shape=jax.ShapeDtypeStruct((B, c_out, t_pad), out_dtype),
        grid_spec=pltpu.PrefetchScalarGridSpec(
            num_scalar_prefetch=0,
            grid=(B, n_t),
            in_specs=[
                pl.BlockSpec((1, c1, tile_t), lambda b, t: (b, 0, t)),
                pl.BlockSpec((1, c_out, t2), lambda b, t: (b, 0, 0)),
                pl.BlockSpec((1, tile_t), lambda b, t: (0, t)),
                pl.BlockSpec((c_out, c1), lambda b, t: (0, 0)),
                pl.BlockSpec((c_out, 1), lambda b, t: (0, 0)),
                pl.BlockSpec((c_out, 1), lambda b, t: (0, 0)),
                pl.BlockSpec((c_out, 1), lambda b, t: (0, 0)),
            ],
            out_specs=pl.BlockSpec((1, c_out, t_pad), lambda b, t: (b, 0, 0)),
            scratch_shapes=[pltpu.VMEM((2, c_out, 128), jnp.float32)],
        ),
        compiler_params=pltpu.CompilerParams(
            dimension_semantics=("parallel", "arbitrary"),
            vmem_limit_bytes=_vmem_limit(footprint)),
    )(x1, z2, idx, w1, bias2, gamma2, beta2)
    return out if t_pad == t_true else out[:, :, :t_true]


_GATHER_T2_MAX = 2048   # beyond this the one-hot gather matmul stops being cheap


def _branch(x_nat, x_oth, w_nat, w_oth, bias, gamma, beta, *, eps, t_tile_target):
    """gLN(w_nat @ x_nat + w_oth @ nearest(x_oth -> T_nat) + bias)."""
    t_out = x_nat.shape[-1]
    t_oth = x_oth.shape[-1]
    if t_oth == t_out:
        return _conv_gln_split(x_nat, x_oth, w_nat, w_oth, bias, gamma, beta,
                               eps=eps, t_tile_target=t_tile_target)
    if t_oth < t_out and t_oth <= _GATHER_T2_MAX:
        # Conv commutes with the nearest gather: project first (tiny), gather
        # in-kernel -> the upsampled (B, C, T_out) tensor never hits HBM.
        z = jnp.einsum('oc,bct->bot', w_oth, x_oth,
                       preferred_element_type=jnp.float32).astype(x_nat.dtype)
        return _conv_gln_gather(x_nat, z, w_nat, bias, gamma, beta,
                                eps=eps, t_tile_target=t_tile_target)
    # Other modality longer than (or too long for) the output: gather it down in
    # the wrapper (result is no bigger than this branch's output).
    x_g = jnp.take(x_oth, _nearest_indices(t_out, t_oth), axis=2)
    return _conv_gln_split(x_nat, x_g, w_nat, w_oth, bias, gamma, beta,
                           eps=eps, t_tile_target=t_tile_target)


def concat_fc2(a, v, params, *, eps=1e-8, compute_dtype=None, t_tile_target=4096):
    """a: (B, Ca, Ta), v: (B, Cv, Tv) -> (a_out (B, Ca, Ta), v_out (B, Cv, Tv))."""
    _, ca, _ = a.shape
    cdt = jnp.dtype(compute_dtype) if compute_dtype is not None else a.dtype
    a_c = a.astype(cdt)
    v_c = v.astype(cdt)
    # PyTorch Conv1d(kernel_size=1) weight (C_out, Ca+Cv, 1): drop k and split
    # the input-channel columns so the concat never needs materializing.
    w_wav = params["w_wav"][..., 0].astype(cdt)     # (Ca_out, Ca+Cv)
    w_vid = params["w_video"][..., 0].astype(cdt)   # (Cv_out, Ca+Cv)

    a_out = _branch(a_c, v_c, w_wav[:, :ca], w_wav[:, ca:],
                    params["b_wav"], params["g_wav"], params["beta_wav"],
                    eps=eps, t_tile_target=t_tile_target)
    v_out = _branch(v_c, a_c, w_vid[:, ca:], w_vid[:, :ca],
                    params["b_video"], params["g_video"], params["beta_video"],
                    eps=eps, t_tile_target=t_tile_target)
    return a_out, v_out


# --------------------------------------------------------------------------- #
# pure-JAX reference + tests
# --------------------------------------------------------------------------- #
def _reference(a, v, params, eps=1e-8):
    a = a.astype(jnp.float32)
    v = v.astype(jnp.float32)
    _, _, ta = a.shape
    _, _, tv = v.shape
    if ta == tv:
        sa, sv = a, v
    else:
        sv = jnp.take(v, _nearest_indices(ta, tv), axis=2)
        sa = jnp.take(a, _nearest_indices(tv, ta), axis=2)
    xa = jnp.concatenate([a, sv], axis=1)
    xv = jnp.concatenate([sa, v], axis=1)

    def conv_gln(x, w, b, g, be):
        y = jnp.einsum('oc,bct->bot', w[..., 0].astype(jnp.float32), x)
        y = y + b[None, :, None]
        mean = jnp.mean(y, axis=(1, 2), keepdims=True)
        var = jnp.mean((y - mean) ** 2, axis=(1, 2), keepdims=True)
        return (y - mean) * lax.rsqrt(var + eps) * g[None, :, None] + be[None, :, None]

    a_out = conv_gln(xa, params["w_wav"], params["b_wav"],
                     params["g_wav"], params["beta_wav"])
    v_out = conv_gln(xv, params["w_video"], params["b_video"],
                     params["g_video"], params["beta_video"])
    return a_out, v_out


def _make_params(key, ca, cv):
    cin = ca + cv
    ks = jax.random.split(key, 4)
    return {
        "w_wav": jax.random.normal(ks[0], (ca, cin, 1), jnp.float32) * 0.1,
        "b_wav": jax.random.normal(ks[1], (ca,), jnp.float32) * 0.1,
        "w_video": jax.random.normal(ks[2], (cv, cin, 1), jnp.float32) * 0.1,
        "b_video": jax.random.normal(ks[3], (cv,), jnp.float32) * 0.1,
        "g_wav": jnp.ones((ca,), jnp.float32),
        "beta_wav": jnp.zeros((ca,), jnp.float32),
        "g_video": jnp.ones((cv,), jnp.float32),
        "beta_video": jnp.zeros((cv,), jnp.float32),
    }


if __name__ == "__main__":
    key = jax.random.PRNGKey(0)
    cases = [
        # name,            B, Ca, Cv, Ta,  Tv,  compute_dtype, t_tile_target, tol
        ("f32_small",      2, 8,  8,  32,  12,  None,          4096,          2e-4),
        ("bf16_small",     2, 8,  8,  32,  12,  jnp.bfloat16,  4096,          1.5e-1),
        ("f32_multitile",  1, 16, 8,  500, 40,  None,          128,           2e-3),
        ("f32_equal_T",    2, 8,  8,  300, 300, None,          128,           2e-3),
    ]
    for i, (name, B, ca, cv, ta, tv, cdt, ttt, tol) in enumerate(cases):
        k = jax.random.fold_in(key, i)
        ka, kv, kp = jax.random.split(k, 3)
        a = jax.random.normal(ka, (B, ca, ta), jnp.float32)
        v = jax.random.normal(kv, (B, cv, tv), jnp.float32)
        params = _make_params(kp, ca, cv)

        a_out, v_out = concat_fc2(a, v, params, compute_dtype=cdt,
                                  t_tile_target=ttt)
        a_out, v_out = jax.block_until_ready((a_out, v_out))

        a_ref, v_ref = _reference(a, v, params)
        assert a_out.shape == (B, ca, ta) and v_out.shape == (B, cv, tv), name
        err_a = float(jnp.max(jnp.abs(a_out.astype(jnp.float32) - a_ref)))
        err_v = float(jnp.max(jnp.abs(v_out.astype(jnp.float32) - v_ref)))
        assert err_a < tol and err_v < tol, (name, err_a, err_v)

    print("KERNEL_OK")
</pallas_src>

<mosaic_0001>
module attributes {stable_mosaic.version = 11 : i64} {
  func.func @_fc_gln_gather_kernel(%arg0: i32, %arg1: i32, %arg2: memref<1x8x128xf32, #tpu.memory_space<vmem>>, %arg3: memref<1x8x12xf32, #tpu.memory_space<vmem>>, %arg4: memref<1x128xi32, #tpu.memory_space<vmem>>, %arg5: memref<8x8xf32, #tpu.memory_space<vmem>>, %arg6: memref<8x1xf32, #tpu.memory_space<vmem>>, %arg7: memref<8x1xf32, #tpu.memory_space<vmem>>, %arg8: memref<8x1xf32, #tpu.memory_space<vmem>>, %arg9: memref<1x8x128xf32, #tpu.memory_space<vmem>>, %arg10: memref<2x8x128xf32, #tpu.memory_space<vmem>>) attributes {dimension_semantics = [#tpu.dimension_semantics<parallel>, #tpu.dimension_semantics<arbitrary>], iteration_bounds = array<i64: 2, 1>, scalar_prefetch = 0 : i64, scratch_operands = 1 : i64, tpu.core_type = #tpu.core_type<tc>, window_params = [{transform_indices = @transform_0, window_bounds = array<i64: 1, 8, 128>}, {transform_indices = @transform_1, window_bounds = array<i64: 1, 8, 12>}, {transform_indices = @transform_2, window_bounds = array<i64: 1, 128>}, {pipeline_mode = #tpu.pipeline_mode<synchronous>, transform_indices = @transform_3, window_bounds = array<i64: 8, 8>}, {pipeline_mode = #tpu.pipeline_mode<synchronous>, transform_indices = @transform_4, window_bounds = array<i64: 8, 1>}, {pipeline_mode = #tpu.pipeline_mode<synchronous>, transform_indices = @transform_5, window_bounds = array<i64: 8, 1>}, {pipeline_mode = #tpu.pipeline_mode<synchronous>, transform_indices = @transform_6, window_bounds = array<i64: 8, 1>}, {transform_indices = @transform_7, window_bounds = array<i64: 1, 8, 128>}]} {
    %c0 = arith.constant 0 : index
    %c0_0 = arith.constant 0 : index
    %0 = vector.load %arg5[%c0, %c0_0] : memref<8x8xf32, #tpu.memory_space<vmem>>, vector<8x8xf32>
    %c0_1 = arith.constant 0 : index
    %c0_2 = arith.constant 0 : index
    %c0_3 = arith.constant 0 : index
    %1 = vector.load %arg2[%c0_1, %c0_2, %c0_3] : memref<1x8x128xf32, #tpu.memory_space<vmem>>, vector<1x8x128xf32>
    %2 = vector.shape_cast %1 : vector<1x8x128xf32> to vector<8x128xf32>
    %cst = arith.constant dense<0.000000e+00> : vector<8x128xf32>
    %3 = tpu.matmul %0, %2, %cst {dimension_numbers = #tpu.dot_dimension_numbers<[1], [0], [0], [1], [0, 0, 1, 1], [], []>} : vector<8x8xf32>, vector<8x128xf32>, vector<8x128xf32> -> vector<8x128xf32>
    %c0_4 = arith.constant 0 : index
    %c0_5 = arith.constant 0 : index
    %4 = vector.load %arg4[%c0_4, %c0_5] : memref<1x128xi32, #tpu.memory_space<vmem>>, vector<1x128xi32>
    %5 = tpu.iota {dimensions = array<i32: 0>} : vector<12x1xi32>
    %6 = vector.broadcast %5 : vector<12x1xi32> to vector<12x128xi32>
    %7 = vector.broadcast %4 : vector<1x128xi32> to vector<12x128xi32>
    %8 = arith.cmpi eq, %6, %7 : vector<12x128xi32>
    %9 = arith.extui %8 : vector<12x128xi1> to vector<12x128xi32>
    %10 = arith.sitofp %9 : vector<12x128xi32> to vector<12x128xf32>
    %c0_6 = arith.constant 0 : index
    %c0_7 = arith.constant 0 : index
    %c0_8 = arith.constant 0 : index
    %11 = vector.load %arg3[%c0_6, %c0_7, %c0_8] : memref<1x8x12xf32, #tpu.memory_space<vmem>>, vector<1x8x12xf32>
    %12 = vector.shape_cast %11 : vector<1x8x12xf32> to vector<8x12xf32>
    %cst_9 = arith.constant dense<0.000000e+00> : vector<8x128xf32>
    %13 = tpu.matmul %12, %10, %cst_9 {dimension_numbers = #tpu.dot_dimension_numbers<[1], [0], [0], [1], [0, 0, 1, 1], [], []>} : vector<8x12xf32>, vector<12x128xf32>, vector<8x128xf32> -> vector<8x128xf32>
    %14 = arith.addf %3, %13 : vector<8x128xf32>
    %c0_10 = arith.constant 0 : index
    %c0_11 = arith.constant 0 : index
    %15 = vector.load %arg6[%c0_10, %c0_11] : memref<8x1xf32, #tpu.memory_space<vmem>>, vector<8x1xf32>
    %16 = vector.broadcast %15 : vector<8x1xf32> to vector<8x128xf32>
    %17 = arith.addf %14, %16 : vector<8x128xf32>
    %c0_12 = arith.constant 0 : index
    %c0_13 = arith.constant 0 : index
    %18 = vector.load %arg7[%c0_12, %c0_13] : memref<8x1xf32, #tpu.memory_space<vmem>>, vector<8x1xf32>
    %c0_14 = arith.constant 0 : index
    %c0_15 = arith.constant 0 : index
    %19 = vector.load %arg8[%c0_14, %c0_15] : memref<8x1xf32, #tpu.memory_space<vmem>>, vector<8x1xf32>
    %20 = tpu.iota {dimensions = array<i32: 1>} : vector<1x128xi32>
    %c128_i32 = arith.constant 128 : i32
    %21 = arith.muli %arg1, %c128_i32 : i32
    %22 = vector.broadcast %21 : i32 to vector<1x128xi32>
    %23 = arith.addi %20, %22 : vector<1x128xi32>
    %c32_i32 = arith.constant 32 : i32
    %24 = vector.broadcast %c32_i32 : i32 to vector<1x128xi32>
    %25 = arith.cmpi slt, %23, %24 : vector<1x128xi32>
    %cst_16 = arith.constant 0.000000e+00 : f32
    %26 = vector.shape_cast %25 : vector<1x128xi1> to vector<1x128xi1>
    %27 = vector.broadcast %26 : vector<1x128xi1> to vector<8x128xi1>
    %28 = vector.broadcast %cst_16 : f32 to vector<8x128xf32>
    %29 = arith.select %27, %17, %28 : vector<8x128xi1>, vector<8x128xf32>
    %30 = vector.shape_cast %29 : vector<8x128xf32> to vector<1x8x128xf32>
    %cst_17 = arith.constant dense<0.000000e+00> : vector<1xf32>
    %31 = vector.multi_reduction <add>, %30, %cst_17 [1, 2] : vector<1x8x128xf32> to vector<1xf32>
    %32 = vector.shape_cast %31 : vector<1xf32> to vector<1x1x1xf32>
    %33 = vector.extract %32[0, 0, 0] : f32 from vector<1x1x1xf32>
    %34 = arith.mulf %29, %29 : vector<8x128xf32>
    %35 = vector.shape_cast %34 : vector<8x128xf32> to vector<1x8x128xf32>
    %cst_18 = arith.constant dense<0.000000e+00> : vector<1xf32>
    %36 = vector.multi_reduction <add>, %35, %cst_18 [1, 2] : vector<1x8x128xf32> to vector<1xf32>
    %37 = vector.shape_cast %36 : vector<1xf32> to vector<1x1x1xf32>
    %38 = vector.extract %37[0, 0, 0] : f32 from vector<1x1x1xf32>
    %cst_19 = arith.constant 3.906250e-03 : f32
    %39 = arith.mulf %33, %cst_19 : f32
    %cst_20 = arith.constant 3.906250e-03 : f32
    %40 = arith.mulf %38, %cst_20 : f32
    %41 = arith.mulf %39, %39 : f32
    %42 = arith.subf %40, %41 : f32
    %cst_21 = arith.constant 0.000000e+00 : f32
    %43 = arith.maximumf %42, %cst_21 : f32
    %cst_22 = arith.constant 9.99999993E-9 : f32
    %44 = arith.addf %43, %cst_22 : f32
    %45 = math.rsqrt %44 : f32
    %46 = vector.broadcast %45 : f32 to vector<8x1xf32>
    %47 = arith.mulf %18, %46 : vector<8x1xf32>
    %48 = vector.broadcast %39 : f32 to vector<8x1xf32>
    %49 = arith.mulf %48, %47 : vector<8x1xf32>
    %50 = arith.subf %19, %49 : vector<8x1xf32>
    %51 = vector.broadcast %47 : vector<8x1xf32> to vector<8x128xf32>
    %52 = arith.mulf %17, %51 : vector<8x128xf32>
    %53 = vector.broadcast %50 : vector<8x1xf32> to vector<8x128xf32>
    %54 = arith.addf %52, %53 : vector<8x128xf32>
    %c0_23 = arith.constant 0 : index
    %c0_24 = arith.constant 0 : index
    %c0_25 = arith.constant 0 : index
    %55 = vector.load %arg9[%c0_23, %c0_24, %c0_25] : memref<1x8x128xf32, #tpu.memory_space<vmem>>, vector<1x8x128xf32>
    %56 = vector.shape_cast %55 : vector<1x8x128xf32> to vector<8x128xf32>
    %57 = vector.shape_cast %54 : vector<8x128xf32> to vector<1x8x128xf32>
    tpu.vector_store %arg9[%c0_23, %c0_24, %c0_25], %57 {strides = array<i32>} : memref<1x8x128xf32, #tpu.memory_space<vmem>>, vector<1x8x128xf32>,
    return
  }
  func.func @transform_0(%arg0: i32, %arg1: i32) -> (i32, i32, i32) {
    %c0_i32 = arith.constant 0 : i32
    %c0_i32_0 = arith.constant 0 : i32
    return %arg0, %c0_i32, %arg1 : i32, i32, i32
  }
  func.func @transform_1(%arg0: i32, %arg1: i32) -> (i32, i32, i32) {
    %c0_i32 = arith.constant 0 : i32
    %c0_i32_0 = arith.constant 0 : i32
    %c0_i32_1 = arith.constant 0 : i32
    return %arg0, %c0_i32, %c0_i32_0 : i32, i32, i32
  }
  func.func @transform_2(%arg0: i32, %arg1: i32) -> (i32, i32) {
    %c0_i32 = arith.constant 0 : i32
    %c0_i32_0 = arith.constant 0 : i32
    return %c0_i32, %arg1 : i32, i32
  }
  func.func @transform_3(%arg0: i32, %arg1: i32) -> (i32, i32) {
    %c0_i32 = arith.constant 0 : i32
    %c0_i32_0 = arith.constant 0 : i32
    %c0_i32_1 = arith.constant 0 : i32
    return %c0_i32, %c0_i32_0 : i32, i32
  }
  func.func @transform_4(%arg0: i32, %arg1: i32) -> (i32, i32) {
    %c0_i32 = arith.constant 0 : i32
    %c0_i32_0 = arith.constant 0 : i32
    %c0_i32_1 = arith.constant 0 : i32
    return %c0_i32, %c0_i32_0 : i32, i32
  }
  func.func @transform_5(%arg0: i32, %arg1: i32) -> (i32, i32) {
    %c0_i32 = arith.constant 0 : i32
    %c0_i32_0 = arith.constant 0 : i32
    %c0_i32_1 = arith.constant 0 : i32
    return %c0_i32, %c0_i32_0 : i32, i32
  }
  func.func @transform_6(%arg0: i32, %arg1: i32) -> (i32, i32) {
    %c0_i32 = arith.constant 0 : i32
    %c0_i32_0 = arith.constant 0 : i32
    %c0_i32_1 = arith.constant 0 : i32
    return %c0_i32, %c0_i32_0 : i32, i32
  }
  func.func @transform_7(%arg0: i32, %arg1: i32) -> (i32, i32, i32) {
    %c0_i32 = arith.constant 0 : i32
    %c0_i32_0 = arith.constant 0 : i32
    %c0_i32_1 = arith.constant 0 : i32
    return %arg0, %c0_i32, %c0_i32_0 : i32, i32, i32
  }
}

</mosaic_0001>

<llo_original>
// kernel: tpu_custom_call.1
$region0: #{tpu_custom_call.1}
  #allocation0 [shape = 'u32[]', space=smem, size = 0x4, offset = 0x4, fixed_abs, tag = 'smem constant byte address 0x4 - core index']
  #allocation1 [shape = 'u32[72,128]{1,0:T(1,128)}', space=vmem, size = 0x9000, scoped, tag = 'internal scratch']
  #allocation2 [shape = 'f32[2,8,128]{2,1,0:T(8,128)}', space=vmem, size = 0x2000, scoped, tag = 'scratch operand']
  %s0 = inlined_call_operand.vmem [shape: f32[2,8,128], index: 0, kind: input, shape index: {}]
  %s1 = inlined_call_operand.hbm [shape: f32[2,8,12], index: 1, kind: input, shape index: {}]
  %s2 = inlined_call_operand.vmem [shape: s32[1,128], index: 2, kind: input, shape index: {}]
  %s3 = inlined_call_operand.vmem [shape: f32[8,8], index: 3, kind: input, shape index: {}]
  %s4 = inlined_call_operand.vmem [shape: f32[8,1], index: 4, kind: input, shape index: {}]
  %s5 = inlined_call_operand.vmem [shape: f32[8,1], index: 5, kind: input, shape index: {}]
  %s6 = inlined_call_operand.vmem [shape: f32[8,1], index: 6, kind: input, shape index: {}]
  %s7 = inlined_call_operand.hbm [shape: f32[2,8,128], index: 7, kind: output, shape index: {}]
  %s8 = sld [smem:[#allocation0]]
  $region65: #{tpu_custom_call.1} parent=0
    _
  %s10 = ssub.s32 1, %s8
  %s11 = scalar_select 0, %s10, %s8
  $region1: #{tpu_custom_call.1} parent=0
    #allocation3 [shape = 'u8[8192]{0}', space=vmem, size = 0x2000, scoped, tag = 'input window, operand 1']
    #allocation4 [shape = 's32[2]{0}', space=sflag, size = 0x8, scoped, tag = 'scoped memory for tpu_custom_call.1']
    #allocation5 [shape = 's32[2]{0}', space=sflag, size = 0x8, scoped, tag = 'scoped memory for tpu_custom_call.1']
    #allocation6 [shape = 'u8[8192]{0}', space=vmem, size = 0x2000, scoped, tag = 'output window, operand 0']
    %12 = vsyncpa [#allocation4], 0
    %s13 = scalar_lea.sflag [#allocation4], 1
    %14 = vsyncpa %s13, 0
    %15 = vsyncpa [#allocation5], 0
    %s16 = scalar_lea.sflag [#allocation5], 1
    %17 = vsyncpa %s16, 0
    loop: start=0, step=1, limit=4
    $region2: #{tpu_custom_call.1} parent=1 // loop_pre_header
      _
    $region3: #{tpu_custom_call.1} parent=1 // loop_header
      %s19 = sphi 0, %s23
      %p20 = scmp.ge.s32.totalorder %s19, 4
      %s26 = sphi 0, %s38
      %s27 = sphi 0, %s34
      %s28 = sphi 0, %s26
      %s29 = sphi 0, %s27
      %s30 = sphi 0, %s28
      %s31 = sphi 0, %s29
      %s43 = sphi 0, %s45
      %s46 = sphi 0, %s43
      %s47 = sphi 0, %s46
      %s63 = sphi 0, %s47
      %s69 = sphi 0, %s71
      %s72 = sphi 0, %s69
      %s73 = sphi 0, %s72
      %s89 = sphi 0, %s73
      %s95 = sphi 0, %s97
      %s98 = sphi 0, %s95
      %s99 = sphi 0, %s98
      %s115 = sphi 0, %s99
      %s119 = sphi 0, %s119
      %s121 = sphi 0, %s119
      %s122 = sphi 0, %s121
      %s136 = sphi 0, %s122
      %s140 = sphi 0, %s140
      %s142 = sphi 0, %s140
      %s143 = sphi 0, %s142
      %s157 = sphi 0, %s143
      %s161 = sphi 0, %s161
      %s163 = sphi 0, %s161
      %s164 = sphi 0, %s163
      %s178 = sphi 0, %s164
      %s182 = sphi 0, %s182
      %s184 = sphi 0, %s182
      %s185 = sphi 0, %s184
      %s199 = sphi 0, %s185
      %s205 = sphi 0, %s207
      %s208 = sphi 0, %s205
      %s209 = sphi 0, %s208
      %s225 = sphi 0, %s209
    $region4: #{tpu_custom_call.1} parent=1 // loop_header_branch
      %22 = sbr.rel (%p20) target = $region8
    $region5: #{tpu_custom_call.1} parent=1 // loop_body
      %s24 = ssub.s32 %s19, 1
      %s25 = ssub.s32 %s19, 2
      %s32 = sadd.s32 1, %s27
      %p33 = scmp.ge.s32.totalorder %s32, 1
      %s34 = scalar_select %p33, 0, %s32
      %s35 = sadd.s32 1, %s26
      %s36 = scalar_select %p33, %s35, %s26
      %p37 = scmp.ge.s32.totalorder %s36, 2
      %s38 = scalar_select %p37, 0, %s36
      %s39 = ssub.s32 %s26, %s38
      %s40 = ssub.s32 %s27, %s34
      %s41 = sor.u32 %s39, %s40
      %p42 = scmp.eq.s32.totalorder %s41, 0
      %s44 = sadd.s32 %s43, 1
      %s45 = scalar_select %p42, %s43, %s44
      %p48 = pneg %p42
      %p49 = scmp.eq.s32.totalorder %s19, 1
      %p50 = por %p48, %p49
      %p51 = scmp.ne.s32.totalorder %s43, %s46
      %p52 = scmp.eq.s32.totalorder %s19, 0
      %p53 = por %p51, %p52
      %p54 = scmp.ne.s32.totalorder %s43, %s46
      %p55 = scmp.eq.s32.totalorder %s24, 1
      %p56 = por %p54, %p55
      %p57 = scmp.ne.s32.totalorder %s46, %s47
      %p58 = scmp.eq.s32.totalorder %s24, 0
      %p59 = por %p57, %p58
      %p60 = scmp.ne.s32.totalorder %s46, %s47
      %p61 = scmp.eq.s32.totalorder %s25, 1
      %p62 = por %p60, %p61
      %p64 = scmp.ne.s32.totalorder %s47, %s63
      %p65 = scmp.eq.s32.totalorder %s25, 0
      %p66 = por %p64, %p65
      %s67 = ssub.s32 %s26, %s38
      %p68 = scmp.eq.s32.totalorder %s67, 0
      %s70 = sadd.s32 %s69, 1
      %s71 = scalar_select %p68, %s69, %s70
      %p74 = pneg %p68
      %p75 = scmp.eq.s32.totalorder %s19, 1
      %p76 = por %p74, %p75
      %p77 = scmp.ne.s32.totalorder %s69, %s72
      %p78 = scmp.eq.s32.totalorder %s19, 0
      %p79 = por %p77, %p78
      %p80 = scmp.ne.s32.totalorder %s69, %s72
      %p81 = scmp.eq.s32.totalorder %s24, 1
      %p82 = por %p80, %p81
      %p83 = scmp.ne.s32.totalorder %s72, %s73
      %p84 = scmp.eq.s32.totalorder %s24, 0
      %p85 = por %p83, %p84
      %p86 = scmp.ne.s32.totalorder %s72, %s73
      %p87 = scmp.eq.s32.totalorder %s25, 1
      %p88 = por %p86, %p87
      %p90 = scmp.ne.s32.totalorder %s73, %s89
      %p91 = scmp.eq.s32.totalorder %s25, 0
      %p92 = por %p90, %p91
      %s93 = ssub.s32 %s27, %s34
      %p94 = scmp.eq.s32.totalorder %s93, 0
      %s96 = sadd.s32 %s95, 1
      %s97 = scalar_select %p94, %s95, %s96
      %p100 = pneg %p94
      %p101 = scmp.eq.s32.totalorder %s19, 1
      %p102 = por %p100, %p101
      %p103 = scmp.ne.s32.totalorder %s95, %s98
      %p104 = scmp.eq.s32.totalorder %s19, 0
      %p105 = por %p103, %p104
      %p106 = scmp.ne.s32.totalorder %s95, %s98
      %p107 = scmp.eq.s32.totalorder %s24, 1
      %p108 = por %p106, %p107
      %p109 = scmp.ne.s32.totalorder %s98, %s99
      %p110 = scmp.eq.s32.totalorder %s24, 0
      %p111 = por %p109, %p110
      %p112 = scmp.ne.s32.totalorder %s98, %s99
      %p113 = scmp.eq.s32.totalorder %s25, 1
      %p114 = por %p112, %p113
      %p116 = scmp.ne.s32.totalorder %s99, %s115
      %p117 = scmp.eq.s32.totalorder %s25, 0
      %p118 = por %p116, %p117
      %s120 = sadd.s32 %s119, 1
      %p123 = scmp.eq.s32.totalorder %s19, 1
      %p124 = scmp.ne.s32.totalorder %s119, %s121
      %p125 = scmp.eq.s32.totalorder %s19, 0
      %p126 = por %p124, %p125
      %p127 = scmp.ne.s32.totalorder %s119, %s121
      %p128 = scmp.eq.s32.totalorder %s24, 1
      %p129 = por %p127, %p128
      %p130 = scmp.ne.s32.totalorder %s121, %s122
      %p131 = scmp.eq.s32.totalorder %s24, 0
      %p132 = por %p130, %p131
      %p133 = scmp.ne.s32.totalorder %s121, %s122
      %p134 = scmp.eq.s32.totalorder %s25, 1
      %p135 = por %p133, %p134
      %p137 = scmp.ne.s32.totalorder %s122, %s136
      %p138 = scmp.eq.s32.totalorder %s25, 0
      %p139 = por %p137, %p138
      %s141 = sadd.s32 %s140, 1
      %p144 = scmp.eq.s32.totalorder %s19, 1
      %p145 = scmp.ne.s32.totalorder %s140, %s142
      %p146 = scmp.eq.s32.totalorder %s19, 0
      %p147 = por %p145, %p146
      %p148 = scmp.ne.s32.totalorder %s140, %s142
      %p149 = scmp.eq.s32.totalorder %s24, 1
      %p150 = por %p148, %p149
      %p151 = scmp.ne.s32.totalorder %s142, %s143
      %p152 = scmp.eq.s32.totalorder %s24, 0
      %p153 = por %p151, %p152
      %p154 = scmp.ne.s32.totalorder %s142, %s143
      %p155 = scmp.eq.s32.totalorder %s25, 1
      %p156 = por %p154, %p155
      %p158 = scmp.ne.s32.totalorder %s143, %s157
      %p159 = scmp.eq.s32.totalorder %s25, 0
      %p160 = por %p158, %p159
      %s162 = sadd.s32 %s161, 1
      %p165 = scmp.eq.s32.totalorder %s19, 1
      %p166 = scmp.ne.s32.totalorder %s161, %s163
      %p167 = scmp.eq.s32.totalorder %s19, 0
      %p168 = por %p166, %p167
      %p169 = scmp.ne.s32.totalorder %s161, %s163
      %p170 = scmp.eq.s32.totalorder %s24, 1
      %p171 = por %p169, %p170
      %p172 = scmp.ne.s32.totalorder %s163, %s164
      %p173 = scmp.eq.s32.totalorder %s24, 0
      %p174 = por %p172, %p173
      %p175 = scmp.ne.s32.totalorder %s163, %s164
      %p176 = scmp.eq.s32.totalorder %s25, 1
      %p177 = por %p175, %p176
      %p179 = scmp.ne.s32.totalorder %s164, %s178
      %p180 = scmp.eq.s32.totalorder %s25, 0
      %p181 = por %p179, %p180
      %s183 = sadd.s32 %s182, 1
      %p186 = scmp.eq.s32.totalorder %s19, 1
      %p187 = scmp.ne.s32.totalorder %s182, %s184
      %p188 = scmp.eq.s32.totalorder %s19, 0
      %p189 = por %p187, %p188
      %p190 = scmp.ne.s32.totalorder %s182, %s184
      %p191 = scmp.eq.s32.totalorder %s24, 1
      %p192 = por %p190, %p191
      %p193 = scmp.ne.s32.totalorder %s184, %s185
      %p194 = scmp.eq.s32.totalorder %s24, 0
      %p195 = por %p193, %p194
      %p196 = scmp.ne.s32.totalorder %s184, %s185
      %p197 = scmp.eq.s32.totalorder %s25, 1
      %p198 = por %p196, %p197
      %p200 = scmp.ne.s32.totalorder %s185, %s199
      %p201 = scmp.eq.s32.totalorder %s25, 0
      %p202 = por %p200, %p201
      %s203 = ssub.s32 %s26, %s38
      %p204 = scmp.eq.s32.totalorder %s203, 0
      %s206 = sadd.s32 %s205, 1
      %s207 = scalar_select %p204, %s205, %s206
      %p210 = pneg %p204
      %p211 = scmp.eq.s32.totalorder %s19, 1
      %p212 = por %p210, %p211
      %p213 = scmp.ne.s32.totalorder %s205, %s208
      %p214 = scmp.eq.s32.totalorder %s19, 0
      %p215 = por %p213, %p214
      %p216 = scmp.ne.s32.totalorder %s205, %s208
      %p217 = scmp.eq.s32.totalorder %s24, 1
      %p218 = por %p216, %p217
      %p219 = scmp.ne.s32.totalorder %s208, %s209
      %p220 = scmp.eq.s32.totalorder %s24, 0
      %p221 = por %p219, %p220
      %p222 = scmp.ne.s32.totalorder %s208, %s209
      %p223 = scmp.eq.s32.totalorder %s25, 1
      %p224 = por %p222, %p223
      %p226 = scmp.ne.s32.totalorder %s209, %s225
      %p227 = scmp.eq.s32.totalorder %s25, 0
      %p228 = por %p226, %p227
      %p229 = scmp.le.s32.totalorder 1, %s19
      %p230 = scmp.lt.s32.totalorder %s19, 3
      %p231 = pnand %p229, %p230
      %p232 = pneg %p231
      // Predicated region
      $region9: #{tpu_custom_call.1} parent=5 // pred_check
        _
      $region10: #{tpu_custom_call.1} parent=5 // pred_check_branch
        %234 = sbr.rel (%p231) target = $region12
      $region11: #{tpu_custom_call.1} parent=5 // pred_region
        %s235 = ssub.s32 %s19, 1
        // Predicated region
        $region13: #{tpu_custom_call.1} parent=11 // pred_check
          %p236 = pneg %p111
        $region14: #{tpu_custom_call.1} parent=11 // pred_check_branch
          %238 = sbr.rel (%p236) target = $region16
        $region15: #{tpu_custom_call.1} parent=11 // pred_region
          %p239 = scmp.lt.s32.totalorder %s29, 0
          %s240 = scalar_select %p239, %s29, 0
          %s241 = scalar_lea.vmem %s2, %s240
        $region16: #{tpu_custom_call.1} parent=11 // pred_fallthru
          _
        // Predicated region
        $region17: #{tpu_custom_call.1} parent=11 // pred_check
          %p242 = pneg %p132
        $region18: #{tpu_custom_call.1} parent=11 // pred_check_branch
          %244 = sbr.rel (%p242) target = $region20
        $region19: #{tpu_custom_call.1} parent=11 // pred_region
          _
        $region20: #{tpu_custom_call.1} parent=11 // pred_fallthru
          _
        // Predicated region
        $region21: #{tpu_custom_call.1} parent=11 // pred_check
          %p245 = pneg %p153
        $region22: #{tpu_custom_call.1} parent=11 // pred_check_branch
          %247 = sbr.rel (%p245) target = $region24
        $region23: #{tpu_custom_call.1} parent=11 // pred_region
          _
        $region24: #{tpu_custom_call.1} parent=11 // pred_fallthru
          _
        // Predicated region
        $region25: #{tpu_custom_call.1} parent=11 // pred_check
          %p248 = pneg %p174
        $region26: #{tpu_custom_call.1} parent=11 // pred_check_branch
          %250 = sbr.rel (%p248) target = $region28
        $region27: #{tpu_custom_call.1} parent=11 // pred_region
          _
        $region28: #{tpu_custom_call.1} parent=11 // pred_fallthru
          _
        // Predicated region
        $region29: #{tpu_custom_call.1} parent=11 // pred_check
          %p251 = pneg %p195
        $region30: #{tpu_custom_call.1} parent=11 // pred_check_branch
          %253 = sbr.rel (%p251) target = $region32
        $region31: #{tpu_custom_call.1} parent=11 // pred_region
          _
        $region32: #{tpu_custom_call.1} parent=11 // pred_fallthru
          _
      $region12: #{tpu_custom_call.1} parent=5 // pred_fallthru
        _
      %p254 = scmp.lt.s32.totalorder %s19, 2
      // Predicated region
      $region33: #{tpu_custom_call.1} parent=5 // pred_check
        %p255 = pneg %p254
      $region34: #{tpu_custom_call.1} parent=5 // pred_check_branch
        %257 = sbr.rel (%p255) target = $region36
      $region35: #{tpu_custom_call.1} parent=5 // pred_region
        // Predicated region
        $region37: #{tpu_custom_call.1} parent=35 // pred_check
          %p258 = pneg %p53
        $region38: #{tpu_custom_call.1} parent=35 // pred_check_branch
          %260 = sbr.rel (%p258) target = $region40
        $region39: #{tpu_custom_call.1} parent=35 // pred_region
          %p261 = scmp.lt.s32.totalorder %s26, 1
          %s262 = scalar_select %p261, %s26, 1
          %p263 = scmp.lt.s32.totalorder %s27, 0
          %s264 = scalar_select %p263, %s27, 0
          %s265 = sadd.s32 %s264, %s262
          %s266 = smul.addr %s265, 8
          %s267 = scalar_lea.vmem %s0, %s266
        $region40: #{tpu_custom_call.1} parent=35 // pred_fallthru
          _
        // Predicated region
        $region41: #{tpu_custom_call.1} parent=35 // pred_check
          %p268 = pneg %p79
        $region42: #{tpu_custom_call.1} parent=35 // pred_check_branch
          %270 = sbr.rel (%p268) target = $region44
        $region43: #{tpu_custom_call.1} parent=35 // pred_region
          %s271 = sand.u32 %s69, 1
          %s272 = scalar_lea.sflag [#allocation4], %s271
          %s273 = sand.u32 %s69, 1
          %s274 = smul.addr %s273, 8
          %s275 = scalar_lea.vmem [#allocation3], %s274
          %277 = vsyncadd %s272, 0
          %s278 = smul.addr %s26, 8
          %s279 = scalar_lea.hbm %s1, %s278
          %s281 = sshll.u32 %s279, 4
          %s282 = int_to_ptr.hbm [resolvable:$true] %s281
          %s283 = sshll.u32 %s275, 4
          %s284 = int_to_ptr.vmem [resolvable:$true] %s283
          %286 = dma.hbm_to_vmem [thread:$0]  %s282, 128, %s284, %s272
        $region44: #{tpu_custom_call.1} parent=35 // pred_fallthru
          _
      $region36: #{tpu_custom_call.1} parent=5 // pred_fallthru
        _
      %p287 = scmp.le.s32.totalorder 1, %s19
      %p288 = scmp.lt.s32.totalorder %s19, 3
      %p289 = pnand %p287, %p288
      %p290 = pneg %p289
      // Predicated region
      $region45: #{tpu_custom_call.1} parent=5 // pred_check
        _
      $region46: #{tpu_custom_call.1} parent=5 // pred_check_branch
        %292 = sbr.rel (%p289) target = $region48
      $region47: #{tpu_custom_call.1} parent=5 // pred_region
        %s293 = ssub.s32 %s19, 1
        %s294 = sand.u32 %s72, 1
        %s295 = scalar_lea.sflag [#allocation4], %s294
        %s296 = sand.u32 %s72, 1
        %s297 = smul.addr %s296, 8
        %s298 = scalar_lea.vmem [#allocation3], %s297
        // Predicated region
        $region49: #{tpu_custom_call.1} parent=47 // pred_check
          %p299 = pneg %p85
        $region50: #{tpu_custom_call.1} parent=47 // pred_check_branch
          %301 = sbr.rel (%p299) target = $region52
        $region51: #{tpu_custom_call.1} parent=47 // pred_region
          %303 = dma.done %s295, 128
        $region52: #{tpu_custom_call.1} parent=47 // pred_fallthru
          _
        %p304 = scmp.lt.s32.totalorder %s28, 1
        %s305 = scalar_select %p304, %s28, 1
        %p306 = scmp.lt.s32.totalorder %s29, 0
        %s307 = scalar_select %p306, %s29, 0
        %s308 = sadd.s32 %s307, %s305
        %s309 = smul.addr %s308, 8
        %s310 = scalar_lea.vmem %s0, %s309
        %p311 = pneg %p59
        %p312 = pneg %p56
        %s313 = sand.u32 %s72, 1
        %s314 = scalar_lea.sflag [#allocation4], %s313
        %s315 = sand.u32 %s72, 1
        %s316 = smul.addr %s315, 8
        %s317 = scalar_lea.vmem [#allocation3], %s316
        %p318 = pneg %p85
        %p319 = pneg %p82
        %p320 = scmp.lt.s32.totalorder %s29, 0
        %s321 = scalar_select %p320, %s29, 0
        %s322 = scalar_lea.vmem %s2, %s321
        %p323 = pneg %p111
        %p324 = pneg %p108
        %p325 = pneg %p132
        %p326 = pneg %p129
        %p327 = pneg %p153
        %p328 = pneg %p150
        %p329 = pneg %p174
        %p330 = pneg %p171
        %p331 = pneg %p195
        %p332 = pneg %p192
        %p333 = pneg %p221
        %p334 = pneg %p218
        %s335 = sand.u32 %s208, 1
        %s336 = scalar_lea.sflag [#allocation5], %s335
        %s337 = sand.u32 %s208, 1
        %s338 = smul.addr %s337, 8
        %s339 = scalar_lea.vmem [#allocation6], %s338
        %p340 = scmp.lt.s32.totalorder %s28, 1
        %s341 = scalar_select %p340, %s28, 1
        %p342 = scmp.lt.s32.totalorder %s29, 0
        %s343 = scalar_select %p342, %s29, 0
        %s344 = sadd.s32 %s343, %s341
        %s345 = smul.addr %s344, 8
        %s346 = scalar_lea.vmem %s0, %s345
        %p347 = scmp.lt.s32.totalorder %s29, 0
        %s348 = scalar_select %p347, %s29, 0
        %s349 = scalar_lea.vmem %s2, %s348
        %v350 = vld [vmem:[%s3] sm:$0xff]
        %v351 = vld [vmem:[%s346] sm:$0xff]
        %v352 = vld [vmem:[%s349] sm:$0x1]
        %v353 = vlaneseq
        %v354 = vshrl.u32 %v353, 7
        %v355 = vadd.s32 %v354, 8
        %v356 = vperm.slane %v352, 0
        %vm357 = vcmp.eq.s32.totalorder %v354, %v356
        %vm358 = vcmp.eq.s32.totalorder %v355, %v356
        %v359 = vsel %vm357, 1, 0
        %v360 = vsel %vm358, 1, 0
        %v361 = vcvt.s32.f32 %v359
        %v362 = vcvt.s32.f32 %v360
        %v363 = vld [vmem:[%s298] sm:$0xff]
        %vm364 = vcmask 97280
        %v366 = vsel %vm364, %v363, 0
        %vm368 = vcmask 1043456
        %v370 = vsel %vm368, %v362, 0
        %372 = vmatpush.msra.mxu0 0.0
        %373 = vmatpush.msra.mxu0 0.0
        %374 = vmatpush.msra.mxu0 0.0
        %375 = vmatpush.msra.mxu0 0.0
        %376 = vmatpush.msra.mxu0 0.0
        %377 = vmatpush.msra.mxu0 0.0
        %378 = vmatpush.msra.mxu0 0.0
        %379 = vmatpush.msra.mxu0 0.0
        %380 = vmatpush.msra.mxu0 0.0
        %381 = vmatpush.msra.mxu0 0.0
        %382 = vmatpush.msra.mxu0 0.0
        %383 = vmatpush.msra.mxu0 0.0
        %384 = vmatpush.msra.mxu0 0.0
        %385 = vmatpush.msra.mxu0 0.0
        %386 = vmatpush.msra.mxu0 %v370
        %387 = vmatpush.msra.mxu0 %v361
        %388 = vmatmul.f32.gmra.mxu0 %v366
        %v389 = vpop.f32.mrf.mxu0
        %v390 = vadd.f32 0.0, %v389
        %391 = vdwg.mxu0
        %vm392 = vcmask 64512
        %v394 = vsel %vm392, %v350, 0
        %396 = vmatpush.msra.mxu0 0.0
        %397 = vmatpush.msra.mxu0 0.0
        %398 = vmatpush.msra.mxu0 0.0
        %399 = vmatpush.msra.mxu0 0.0
        %400 = vmatpush.msra.mxu0 0.0
        %401 = vmatpush.msra.mxu0 0.0
        %402 = vmatpush.msra.mxu0 0.0
        %403 = vmatpush.msra.mxu0 0.0
        %404 = vmatpush.msra.mxu0 0.0
        %405 = vmatpush.msra.mxu0 0.0
        %406 = vmatpush.msra.mxu0 0.0
        %407 = vmatpush.msra.mxu0 0.0
        %408 = vmatpush.msra.mxu0 0.0
        %409 = vmatpush.msra.mxu0 0.0
        %410 = vmatpush.msra.mxu0 0.0
        %411 = vmatpush.msra.mxu0 %v351
        %412 = vmatmul.f32.gmra.mxu0 %v394
        %v413 = vpop.f32.mrf.mxu0
        %v414 = vadd.f32 %v390, %v413
        %415 = vdwg.mxu0
        %v416 = vld [vmem:[%s4] sm:$0xff]
        %418 = vset.pattern.permute.xlu0 0
        %419 = vperm.xlu0 %418, %v416
        %v420 = vpop.permute.xlu0 %419
        %v422 = vadd.f32 %v414, %v420
        %v423 = vld [vmem:[%s5] sm:$0xff]
        %v424 = vld [vmem:[%s6] sm:$0xff]
        %v425 = vlaneseq
        %v426 = vand.u32 %v425, 127
        %s427 = smul.u32 %s29, 128
        %v428 = vstv %s427
        %v429 = vadd.s32 %v426, %v428
        %vm430 = vcmp.lt.s32.totalorder %v429, 32
        %v431 = vsel %vm430, 1, 0
        %vm432 = vcmp.eq.s32.totalorder %v431, 1
        %v433 = vsel %vm432, %v422, 0.0
        %434 = vadd.xlane.f32.xlu0 %v433
        %v435 = vpop.xlane.xlu0 %434
        %v436 = vrot.slane %v435, 4
        %v437 = vadd.f32 %v435, %v436
        %v438 = vrot.slane %v437, 2
        %v439 = vadd.f32 %v437, %v438
        %v440 = vrot.slane %v439, 1
        %v441 = vadd.f32 %v439, %v440
        %s442 = vtos %v441
        %v443 = vmul.f32 %v433, %v433
        %444 = vadd.xlane.f32.xlu0 %v443
        %v445 = vpop.xlane.xlu0 %444
        %v446 = vrot.slane %v445, 4
        %v447 = vadd.f32 %v445, %v446
        %v448 = vrot.slane %v447, 2
        %v449 = vadd.f32 %v447, %v448
        %v450 = vrot.slane %v449, 1
        %v451 = vadd.f32 %v449, %v450
        %s452 = vtos %v451
        %s453 = smul.f32 %s442, 0.00390625
        %s454 = smul.f32 %s452, 0.00390625
        %s455 = smul.f32 %s453, %s453
        %s456 = ssub.f32 %s454, %s455
        %s457 = smax.f32 %s456, 0.0
        %s458 = sadd.f32 %s457, 1e-08
        %v459 = vstv %s458
        %v460 = vrsqrt.pop %v459
        %v461 = vmul.f32 %v460, %v459
        %v462 = vmul.f32 %v461, %v460
        %v463 = vmul.f32 0.5, %v462
        %v464 = vsub.f32 1.5, %v463
        %v465 = vmul.f32 %v460, %v464
        %vm466 = vweird.f32 %v459
        %vm467 = vweird.f32 %v460
        %vm468 = vmor %vm466, %vm467
        %v469 = vsel %vm468, %v460, %v465
        %s470 = vtos %v469
        %v471 = vstv %s470
        %v472 = vmul.f32 %v423, %v471
        %v473 = vstv %s453
        %v474 = vmul.f32 %v473, %v472
        %v475 = vsub.f32 %v424, %v474
        %477 = vset.pattern.permute.xlu0 0
        %478 = vperm.xlu0 %477, %v472
        %v479 = vpop.permute.xlu0 %478
        %v481 = vmul.f32 %v422, %v479
        %483 = vset.pattern.permute.xlu0 0
        %484 = vperm.xlu0 %483, %v475
        %v485 = vpop.permute.xlu0 %484
        %v487 = vadd.f32 %v481, %v485
        %488 = vst [vmem:[%s339] sm:$0xff] %v487
        %s489 = sand.u32 %s208, 1
        %s490 = scalar_lea.sflag [#allocation5], %s489
        %s491 = sand.u32 %s208, 1
        %s492 = smul.addr %s491, 8
        %s493 = scalar_lea.vmem [#allocation6], %s492
        // Predicated region
        $region53: #{tpu_custom_call.1} parent=47 // pred_check
          %p494 = pneg %p218
        $region54: #{tpu_custom_call.1} parent=47 // pred_check_branch
          %496 = sbr.rel (%p494) target = $region56
        $region55: #{tpu_custom_call.1} parent=47 // pred_region
          %498 = vsyncadd %s490, 0
          %s499 = smul.addr %s28, 8
          %s500 = scalar_lea.hbm %s7, %s499
          %s502 = sshll.u32 %s493, 4
          %s503 = int_to_ptr.vmem [resolvable:$true] %s502
          %s504 = sshll.u32 %s500, 4
          %s505 = int_to_ptr.hbm [resolvable:$true] %s504
          %507 = dma.vmem_to_hbm [thread:$0]  %s503, 128, %s505, %s490
        $region56: #{tpu_custom_call.1} parent=47 // pred_fallthru
          _
      $region48: #{tpu_custom_call.1} parent=5 // pred_fallthru
        _
      %p508 = scmp.le.s32.totalorder 2, %s19
      // Predicated region
      $region57: #{tpu_custom_call.1} parent=5 // pred_check
        %p509 = pneg %p508
      $region58: #{tpu_custom_call.1} parent=5 // pred_check_branch
        %511 = sbr.rel (%p509) target = $region60
      $region59: #{tpu_custom_call.1} parent=5 // pred_region
        %s512 = ssub.s32 %s19, 2
        // Predicated region
        $region61: #{tpu_custom_call.1} parent=59 // pred_check
          %p513 = pneg %p224
        $region62: #{tpu_custom_call.1} parent=59 // pred_check_branch
          %515 = sbr.rel (%p513) target = $region64
        $region63: #{tpu_custom_call.1} parent=59 // pred_region
          %s516 = sand.u32 %s209, 1
          %s517 = scalar_lea.sflag [#allocation5], %s516
          %s518 = sand.u32 %s209, 1
          %s519 = smul.addr %s518, 8
          %s520 = scalar_lea.vmem [#allocation6], %s519
          %522 = dma.done %s517, 128
        $region64: #{tpu_custom_call.1} parent=59 // pred_fallthru
          _
      $region60: #{tpu_custom_call.1} parent=5 // pred_fallthru
        _
    $region6: #{tpu_custom_call.1} parent=1 // loop_footer
      %s23 = sadd.s32 1, %s19
    $region7: #{tpu_custom_call.1} parent=1 // loop_footer_branch
      %18 = sbr.rel target = $region3
    $region8: #{tpu_custom_call.1} parent=1 // loop_exit
      _
    %523 = vsyncpa [#allocation4], 1
    %s524 = scalar_lea.sflag [#allocation4], 1
    %525 = vsyncpa %s524, 1
    %526 = vsyncpa [#allocation5], 1
    %s527 = scalar_lea.sflag [#allocation5], 1
    %528 = vsyncpa %s527, 1

</llo_original>
